<compile_context>
chip_gen: v5e
topology: v5e:2x2
jax: 0.10.0
libtpu: 0.0.40
codegen_flags: <defaults>
</compile_context>

<pallas_src>
import functools

import jax
import jax.numpy as jnp
from jax import lax
from jax.experimental import pallas as pl
from jax.experimental.pallas import tpu as pltpu

HIDDEN = 40          # true hidden width of the action MLP
HIDDEN_PAD = 128     # lane-dense padded hidden width used by the kernel
N_SCORES = 7         # action_scores channels actually used (indices 0..6)
OUT_PAD = 8          # packed kernel output width
LEAKY_SLOPE = 0.01   # nn.LeakyReLU default
SOFTPLUS_THRESHOLD = 20.0

# Packed output column layout produced by the kernel:
#   0: xvel_mean    = s[:, 0]
#   1: xvel_std     = softplus(s[:, 2])
#   2: yawrate_mean = s[:, 3]
#   3: yawrate_std  = softplus(s[:, 5])
#   4: stop_logits  = s[:, 6]
#   5..7: zero pad (never read)
_PACK_SRC_COLS = (0, 2, 3, 5, 6)


def _softplus_torch(x):
    # Matches F.softplus(x, beta=1, threshold=20)
    return jnp.where(x > SOFTPLUS_THRESHOLD, x,
                     jnp.log1p(jnp.exp(jnp.minimum(x, SOFTPLUS_THRESHOLD))))


def _action_mlp_kernel(x_ref, w1_ref, b1_ref, w2_ref, b2_ref, out_ref):
    """x:[tb,F] w1:[F,Hp] b1:[1,Hp] w2:[Hp,8] b2:[1,8] -> packed [tb,8]."""
    h = jnp.dot(x_ref[...], w1_ref[...],
                preferred_element_type=jnp.float32) + b1_ref[...]
    h = jnp.where(h > 0.0, h, LEAKY_SLOPE * h)                  # LeakyReLU
    s = jnp.dot(h.astype(w2_ref.dtype), w2_ref[...],
                preferred_element_type=jnp.float32) + b2_ref[...]
    # softplus only the std columns (1 and 3) of the packed layout
    col = lax.broadcasted_iota(jnp.int32, s.shape, 1)
    needs_sp = (col == 1) | (col == 3)
    out_ref[...] = jnp.where(needs_sp, _softplus_torch(s), s)


def _round_up(x, m):
    return ((x + m - 1) // m) * m


def pack_params(params, C, H, W, compute_dtype=jnp.float32):
    """Fold the center crop into w1's zero rows, pad HIDDEN to 128, and
    permute/pack w2/b2 columns into the kernel's packed output layout."""
    w1, b1, w2, b2 = params["w1"], params["b1"], params["w2"], params["b2"]
    crop = H // 2
    r0, c0 = (H - crop) // 2, (W - crop) // 2
    _, hidden = w1.shape

    # rows of the full (C,H,W) row-major flatten that the crop touches,
    # in the same order as the cropped .view(B, -1) flatten
    ch = jnp.arange(C)[:, None, None]
    ii = jnp.arange(crop)[None, :, None]
    jj = jnp.arange(crop)[None, None, :]
    full_rows = (ch * (H * W) + (r0 + ii) * W + (c0 + jj)).reshape(-1)

    w1_full = jnp.zeros((C * H * W, HIDDEN_PAD), jnp.float32)
    w1_full = w1_full.at[full_rows, :hidden].set(w1)
    b1_pad = jnp.zeros((1, HIDDEN_PAD), jnp.float32).at[:, :hidden].set(b1)

    w2_packed = jnp.zeros((HIDDEN_PAD, OUT_PAD), jnp.float32)
    b2_packed = jnp.zeros((1, OUT_PAD), jnp.float32)
    for dst, src in enumerate(_PACK_SRC_COLS):
        w2_packed = w2_packed.at[:hidden, dst].set(w2[:, src])
        b2_packed = b2_packed.at[:, dst].set(b2[:, src])

    return {
        "w1": w1_full.astype(compute_dtype),     # bf16-able (v6e/v7x)
        "b1": b1_pad,                            # biases stay f32 (f32 acc)
        "w2": w2_packed.astype(compute_dtype),
        "b2": b2_packed,
    }


@functools.partial(jax.jit, static_argnames=("eval_mode", "test_time_amplifier"))
def pvn_stage2_forward(visit_dist_r, packed_params, eval_mode=False,
                       test_time_amplifier=None):
    """Forward pass of PVN_Stage2_Bidomain.

    visit_dist_r: [B, C, H, W] float32 (NCHW).
    Returns ((xvel_mean, xvel_std), (yawrate_mean, yawrate_std),
             stop_logits, value=None) — the parameters of the distributions
    the PyTorch module wraps in FixedNormal / FixedBernoulli.
    """
    w1 = packed_params["w1"]
    b1 = packed_params["b1"]
    w2 = packed_params["w2"]
    b2 = packed_params["b2"]
    B, C, H, W = visit_dist_r.shape
    F_full = C * H * W

    # free contiguous reshape; the center crop lives in w1's zero rows
    x = visit_dist_r.reshape(B, F_full).astype(w1.dtype)

    # pad/tile the batch: multiples of 8 sublanes, 256-wide tiles when large
    if B <= 256:
        tile_b = max(8, _round_up(B, 8))
        B_pad = tile_b
    else:
        tile_b = 256
        B_pad = _round_up(B, tile_b)
    if B_pad != B:
        x = jnp.pad(x, ((0, B_pad - B), (0, 0)))

    packed = pl.pallas_call(
        _action_mlp_kernel,
        out_shape=jax.ShapeDtypeStruct((B_pad, OUT_PAD), jnp.float32),
        grid=(B_pad // tile_b,),
        in_specs=[
            pl.BlockSpec((tile_b, F_full), lambda i: (i, 0)),
            pl.BlockSpec((F_full, HIDDEN_PAD), lambda i: (0, 0)),   # resident
            pl.BlockSpec((1, HIDDEN_PAD), lambda i: (0, 0)),        # resident
            pl.BlockSpec((HIDDEN_PAD, OUT_PAD), lambda i: (0, 0)),  # resident
            pl.BlockSpec((1, OUT_PAD), lambda i: (0, 0)),           # resident
        ],
        out_specs=pl.BlockSpec((tile_b, OUT_PAD), lambda i: (i, 0)),
        compiler_params=pltpu.CompilerParams(
            dimension_semantics=("parallel",)),
    )(x, w1, b1, w2, b2)

    xvel_mean = packed[:B, 0]
    xvel_std = packed[:B, 1]
    yawrate_mean = packed[:B, 2]
    if eval_mode and test_time_amplifier:
        # matches: if eval and params.get('test_time_amplifier')
        yawrate_mean = yawrate_mean * test_time_amplifier
    yawrate_std = packed[:B, 3]
    stop_logits = packed[:B, 4]
    value = None
    return (xvel_mean, xvel_std), (yawrate_mean, yawrate_std), stop_logits, value


def init_params(key, in_features, hidden=HIDDEN, out=N_SCORES):
    """Deterministic torch-Linear-style init (uniform +-1/sqrt(fan_in)),
    in the *original* (unpadded, uncropped) layout."""
    k1, k2, k3, k4 = jax.random.split(key, 4)
    lim1 = 1.0 / jnp.sqrt(jnp.float32(in_features))
    lim2 = 1.0 / jnp.sqrt(jnp.float32(hidden))
    w1 = jax.random.uniform(k1, (in_features, hidden), jnp.float32, -lim1, lim1)
    b1 = jax.random.uniform(k2, (1, hidden), jnp.float32, -lim1, lim1)
    w2 = jax.random.uniform(k3, (hidden, out), jnp.float32, -lim2, lim2)
    b2 = jax.random.uniform(k4, (1, out), jnp.float32, -lim2, lim2)
    return {"w1": w1, "b1": b1, "w2": w2, "b2": b2}


def _reference_forward(visit_dist_r, params):
    """Pure-JAX reference (crop + MLP with the original weights)."""
    B, C, H, W = visit_dist_r.shape
    crop = H // 2
    r0, c0 = (H - crop) // 2, (W - crop) // 2
    x = visit_dist_r[:, :, r0:r0 + crop, c0:c0 + crop].reshape(B, -1)
    h = x @ params["w1"] + params["b1"]
    h = jnp.where(h > 0, h, LEAKY_SLOPE * h)
    s = h @ params["w2"] + params["b2"]
    return (s[:, 0], _softplus_torch(s[:, 2]),
            s[:, 3], _softplus_torch(s[:, 5]), s[:, 6])


if __name__ == "__main__":
    key = jax.random.PRNGKey(0)
    # Small shapes consistent with the module: B=2 rollout steps,
    # map_to_act_channels=2, local_map_size=16 -> crop 8x8 -> F = 2*8*8 = 128.
    B, C, H, W = 2, 2, 16, 16
    k_in, k_par = jax.random.split(key)
    visit_dist_r = jax.random.uniform(k_in, (B, C, H, W), jnp.float32)

    crop = H // 2
    raw_params = init_params(k_par, in_features=C * crop * crop)
    packed_params = pack_params(raw_params, C, H, W)  # f32 compute for exact match

    (xm, xs), (ym, ys), stop_logits, value = pvn_stage2_forward(
        visit_dist_r, packed_params, eval_mode=False)
    jax.block_until_ready((xm, xs, ym, ys, stop_logits))

    # sanity check against pure-JAX reference (original crop + unpadded MLP)
    rxm, rxs, rym, rys, rsl = _reference_forward(visit_dist_r, raw_params)
    for a, b in ((xm, rxm), (xs, rxs), (ym, rym), (ys, rys), (stop_logits, rsl)):
        assert a.shape == (B,)
        assert jnp.allclose(a, b, atol=1e-5, rtol=1e-5), (a, b)
    assert value is None

    print("KERNEL_OK")
</pallas_src>

<mosaic_0001>
module attributes {stable_mosaic.version = 11 : i64} {
  func.func @_action_mlp_kernel(%arg0: i32, %arg1: memref<8x512xf32, #tpu.memory_space<vmem>>, %arg2: memref<512x128xf32, #tpu.memory_space<vmem>>, %arg3: memref<1x128xf32, #tpu.memory_space<vmem>>, %arg4: memref<128x8xf32, #tpu.memory_space<vmem>>, %arg5: memref<1x8xf32, #tpu.memory_space<vmem>>, %arg6: memref<8x8xf32, #tpu.memory_space<vmem>>) attributes {dimension_semantics = [#tpu.dimension_semantics<parallel>], iteration_bounds = array<i64: 1>, scalar_prefetch = 0 : i64, scratch_operands = 0 : i64, tpu.core_type = #tpu.core_type<tc>, window_params = [{transform_indices = @transform_0, window_bounds = array<i64: 8, 512>}, {pipeline_mode = #tpu.pipeline_mode<synchronous>, transform_indices = @transform_1, window_bounds = array<i64: 512, 128>}, {pipeline_mode = #tpu.pipeline_mode<synchronous>, transform_indices = @transform_2, window_bounds = array<i64: 1, 128>}, {pipeline_mode = #tpu.pipeline_mode<synchronous>, transform_indices = @transform_3, window_bounds = array<i64: 128, 8>}, {pipeline_mode = #tpu.pipeline_mode<synchronous>, transform_indices = @transform_4, window_bounds = array<i64: 1, 8>}, {transform_indices = @transform_5, window_bounds = array<i64: 8, 8>}]} {
    %c0 = arith.constant 0 : index
    %c0_0 = arith.constant 0 : index
    %0 = vector.load %arg1[%c0, %c0_0] : memref<8x512xf32, #tpu.memory_space<vmem>>, vector<8x512xf32>
    %c0_1 = arith.constant 0 : index
    %c0_2 = arith.constant 0 : index
    %1 = vector.load %arg2[%c0_1, %c0_2] : memref<512x128xf32, #tpu.memory_space<vmem>>, vector<512x128xf32>
    %cst = arith.constant dense<0.000000e+00> : vector<8x128xf32>
    %2 = tpu.matmul %0, %1, %cst {dimension_numbers = #tpu.dot_dimension_numbers<[1], [0], [0], [1], [0, 0, 1, 1], [], []>} : vector<8x512xf32>, vector<512x128xf32>, vector<8x128xf32> -> vector<8x128xf32>
    %c0_3 = arith.constant 0 : index
    %c0_4 = arith.constant 0 : index
    %3 = vector.load %arg3[%c0_3, %c0_4] : memref<1x128xf32, #tpu.memory_space<vmem>>, vector<1x128xf32>
    %4 = vector.broadcast %3 : vector<1x128xf32> to vector<8x128xf32>
    %5 = arith.addf %2, %4 : vector<8x128xf32>
    %cst_5 = arith.constant 0.000000e+00 : f32
    %6 = vector.broadcast %cst_5 : f32 to vector<8x128xf32>
    %7 = arith.cmpf ogt, %5, %6 : vector<8x128xf32>
    %cst_6 = arith.constant 0.00999999977 : f32
    %8 = vector.broadcast %cst_6 : f32 to vector<8x128xf32>
    %9 = arith.mulf %8, %5 : vector<8x128xf32>
    %10 = arith.select %7, %5, %9 : vector<8x128xi1>, vector<8x128xf32>
    %c0_7 = arith.constant 0 : index
    %c0_8 = arith.constant 0 : index
    %11 = vector.load %arg4[%c0_7, %c0_8] : memref<128x8xf32, #tpu.memory_space<vmem>>, vector<128x8xf32>
    %cst_9 = arith.constant dense<0.000000e+00> : vector<8x8xf32>
    %12 = tpu.matmul %10, %11, %cst_9 {dimension_numbers = #tpu.dot_dimension_numbers<[1], [0], [0], [1], [0, 0, 1, 1], [], []>} : vector<8x128xf32>, vector<128x8xf32>, vector<8x8xf32> -> vector<8x8xf32>
    %c0_10 = arith.constant 0 : index
    %c0_11 = arith.constant 0 : index
    %13 = vector.load %arg5[%c0_10, %c0_11] : memref<1x8xf32, #tpu.memory_space<vmem>>, vector<1x8xf32>
    %14 = vector.broadcast %13 : vector<1x8xf32> to vector<8x8xf32>
    %15 = arith.addf %12, %14 : vector<8x8xf32>
    %16 = tpu.iota {dimensions = array<i32: 1>} : vector<8x8xi32>
    %c1_i32 = arith.constant 1 : i32
    %17 = vector.broadcast %c1_i32 : i32 to vector<8x8xi32>
    %18 = arith.cmpi eq, %16, %17 : vector<8x8xi32>
    %c3_i32 = arith.constant 3 : i32
    %19 = vector.broadcast %c3_i32 : i32 to vector<8x8xi32>
    %20 = arith.cmpi eq, %16, %19 : vector<8x8xi32>
    %21 = arith.ori %18, %20 : vector<8x8xi1>
    %cst_12 = arith.constant 2.000000e+01 : f32
    %22 = vector.broadcast %cst_12 : f32 to vector<8x8xf32>
    %23 = arith.cmpf ogt, %15, %22 : vector<8x8xf32>
    %cst_13 = arith.constant 2.000000e+01 : f32
    %24 = vector.broadcast %cst_13 : f32 to vector<8x8xf32>
    %25 = arith.minimumf %15, %24 : vector<8x8xf32>
    %26 = math.exp %25 : vector<8x8xf32>
    %27 = math.log1p %26 : vector<8x8xf32>
    %28 = arith.select %23, %15, %27 : vector<8x8xi1>, vector<8x8xf32>
    %29 = arith.select %21, %28, %15 : vector<8x8xi1>, vector<8x8xf32>
    %c0_14 = arith.constant 0 : index
    %c0_15 = arith.constant 0 : index
    %30 = vector.load %arg6[%c0_14, %c0_15] : memref<8x8xf32, #tpu.memory_space<vmem>>, vector<8x8xf32>
    tpu.vector_store %arg6[%c0_14, %c0_15], %29 {strides = array<i32>} : memref<8x8xf32, #tpu.memory_space<vmem>>, vector<8x8xf32>,
    return
  }
  func.func @transform_0(%arg0: i32) -> (i32, i32) {
    %c0_i32 = arith.constant 0 : i32
    %c0_i32_0 = arith.constant 0 : i32
    return %arg0, %c0_i32 : i32, i32
  }
  func.func @transform_1(%arg0: i32) -> (i32, i32) {
    %c0_i32 = arith.constant 0 : i32
    %c0_i32_0 = arith.constant 0 : i32
    %c0_i32_1 = arith.constant 0 : i32
    return %c0_i32, %c0_i32_0 : i32, i32
  }
  func.func @transform_2(%arg0: i32) -> (i32, i32) {
    %c0_i32 = arith.constant 0 : i32
    %c0_i32_0 = arith.constant 0 : i32
    %c0_i32_1 = arith.constant 0 : i32
    return %c0_i32, %c0_i32_0 : i32, i32
  }
  func.func @transform_3(%arg0: i32) -> (i32, i32) {
    %c0_i32 = arith.constant 0 : i32
    %c0_i32_0 = arith.constant 0 : i32
    %c0_i32_1 = arith.constant 0 : i32
    return %c0_i32, %c0_i32_0 : i32, i32
  }
  func.func @transform_4(%arg0: i32) -> (i32, i32) {
    %c0_i32 = arith.constant 0 : i32
    %c0_i32_0 = arith.constant 0 : i32
    %c0_i32_1 = arith.constant 0 : i32
    return %c0_i32, %c0_i32_0 : i32, i32
  }
  func.func @transform_5(%arg0: i32) -> (i32, i32) {
    %c0_i32 = arith.constant 0 : i32
    %c0_i32_0 = arith.constant 0 : i32
    return %arg0, %c0_i32 : i32, i32
  }
}

</mosaic_0001>

<llo_original>
// kernel: pvn_stage2_forward.1
$region0: #{pvn_stage2_forward.1}
  #allocation0 [shape = 'u32[]', space=smem, size = 0x4, offset = 0x4, fixed_abs, tag = 'smem constant byte address 0x4 - core index']
  #allocation1 [shape = 'u32[72,128]{1,0:T(1,128)}', space=vmem, size = 0x9000, scoped, tag = 'internal scratch']
  %s0 = inlined_call_operand.vmem [shape: f32[8,512], index: 0, kind: input, shape index: {}]
  %s1 = inlined_call_operand.hbm [shape: f32[512,128], index: 1, kind: input, shape index: {}]
  %s2 = inlined_call_operand.vmem [shape: f32[1,128], index: 2, kind: input, shape index: {}]
  %s3 = inlined_call_operand.vmem [shape: f32[128,8], index: 3, kind: input, shape index: {}]
  %s4 = inlined_call_operand.vmem [shape: f32[1,8], index: 4, kind: input, shape index: {}]
  %s5 = inlined_call_operand.vmem [shape: f32[8,8], index: 5, kind: output, shape index: {}]
  %s6 = sld [smem:[#allocation0]]
  $region34: #{pvn_stage2_forward.1} parent=0
    _
  %s8 = ssub.s32 1, %s6
  %s9 = scalar_select 0, %s8, %s6
  $region1: #{pvn_stage2_forward.1} parent=0
    #allocation2 [shape = 'u8[262144]{0}', space=vmem, size = 0x40000, scoped, tag = 'input window, operand 1, single buffered']
    #allocation3 [shape = 's32[1]{0}', space=sflag, size = 0x4, scoped, tag = 'scoped memory for pvn_stage2_forward.1']
    %10 = vsyncpa [#allocation3], 0
    // Predicated region
    $region2: #{pvn_stage2_forward.1} parent=1 // pred_check
      _
    $region3: #{pvn_stage2_forward.1} parent=1 // pred_check_branch
      %12 = sbr.rel (0) target = $region5
    $region4: #{pvn_stage2_forward.1} parent=1 // pred_region
      _
    $region5: #{pvn_stage2_forward.1} parent=1 // pred_fallthru
      _
    // Predicated region
    $region6: #{pvn_stage2_forward.1} parent=1 // pred_check
      _
    $region7: #{pvn_stage2_forward.1} parent=1 // pred_check_branch
      %14 = sbr.rel (0) target = $region9
    $region8: #{pvn_stage2_forward.1} parent=1 // pred_region
      %16 = vsyncadd [#allocation3], 0
      %s17 = sshll.u32 %s1, 4
      %s18 = int_to_ptr.hbm [resolvable:$true] %s17
      %s19 = sshll.u32 [#allocation2], 4
      %s20 = int_to_ptr.vmem [resolvable:$true] %s19
      %25 = dma.hbm_to_vmem [thread:$0]  %s18, 8192, %s20, [#allocation3], 128, 128, 8
    $region9: #{pvn_stage2_forward.1} parent=1 // pred_fallthru
      _
    // Predicated region
    $region10: #{pvn_stage2_forward.1} parent=1 // pred_check
      _
    $region11: #{pvn_stage2_forward.1} parent=1 // pred_check_branch
      %27 = sbr.rel (0) target = $region13
    $region12: #{pvn_stage2_forward.1} parent=1 // pred_region
      _
    $region13: #{pvn_stage2_forward.1} parent=1 // pred_fallthru
      _
    // Predicated region
    $region14: #{pvn_stage2_forward.1} parent=1 // pred_check
      _
    $region15: #{pvn_stage2_forward.1} parent=1 // pred_check_branch
      %29 = sbr.rel (0) target = $region17
    $region16: #{pvn_stage2_forward.1} parent=1 // pred_region
      _
    $region17: #{pvn_stage2_forward.1} parent=1 // pred_fallthru
      _
    // Predicated region
    $region18: #{pvn_stage2_forward.1} parent=1 // pred_check
      _
    $region19: #{pvn_stage2_forward.1} parent=1 // pred_check_branch
      %31 = sbr.rel (0) target = $region21
    $region20: #{pvn_stage2_forward.1} parent=1 // pred_region
      _
    $region21: #{pvn_stage2_forward.1} parent=1 // pred_fallthru
      _
    // Predicated region
    $region22: #{pvn_stage2_forward.1} parent=1 // pred_check
      _
    $region23: #{pvn_stage2_forward.1} parent=1 // pred_check_branch
      %33 = sbr.rel (0) target = $region25
    $region24: #{pvn_stage2_forward.1} parent=1 // pred_region
      %35 = dma.done [#allocation3], 8192
    $region25: #{pvn_stage2_forward.1} parent=1 // pred_fallthru
      _
    %v36 = vld [vmem:[%s0] sm:$0xff]
    %v37 = vld [vmem:[%s0 + $0x8] sm:$0xff]
    %v38 = vld [vmem:[%s0 + $0x10] sm:$0xff]
    %v39 = vld [vmem:[%s0 + $0x18] sm:$0xff]
    %v40 = vld [vmem:[#allocation2] sm:$0xff]
    %v41 = vld [vmem:[#allocation2 + $0x8] sm:$0xff]
    %v42 = vld [vmem:[#allocation2 + $0x10] sm:$0xff]
    %v43 = vld [vmem:[#allocation2 + $0x18] sm:$0xff]
    %v44 = vld [vmem:[#allocation2 + $0x20] sm:$0xff]
    %v45 = vld [vmem:[#allocation2 + $0x28] sm:$0xff]
    %v46 = vld [vmem:[#allocation2 + $0x30] sm:$0xff]
    %v47 = vld [vmem:[#allocation2 + $0x38] sm:$0xff]
    %v48 = vld [vmem:[#allocation2 + $0x40] sm:$0xff]
    %v49 = vld [vmem:[#allocation2 + $0x48] sm:$0xff]
    %v50 = vld [vmem:[#allocation2 + $0x50] sm:$0xff]
    %v51 = vld [vmem:[#allocation2 + $0x58] sm:$0xff]
    %v52 = vld [vmem:[#allocation2 + $0x60] sm:$0xff]
    %v53 = vld [vmem:[#allocation2 + $0x68] sm:$0xff]
    %v54 = vld [vmem:[#allocation2 + $0x70] sm:$0xff]
    %v55 = vld [vmem:[#allocation2 + $0x78] sm:$0xff]
    %v56 = vld [vmem:[#allocation2 + $0x80] sm:$0xff]
    %v57 = vld [vmem:[#allocation2 + $0x88] sm:$0xff]
    %v58 = vld [vmem:[#allocation2 + $0x90] sm:$0xff]
    %v59 = vld [vmem:[#allocation2 + $0x98] sm:$0xff]
    %v60 = vld [vmem:[#allocation2 + $0xa0] sm:$0xff]
    %v61 = vld [vmem:[#allocation2 + $0xa8] sm:$0xff]
    %v62 = vld [vmem:[#allocation2 + $0xb0] sm:$0xff]
    %v63 = vld [vmem:[#allocation2 + $0xb8] sm:$0xff]
    %v64 = vld [vmem:[#allocation2 + $0xc0] sm:$0xff]
    %v65 = vld [vmem:[#allocation2 + $0xc8] sm:$0xff]
    %v66 = vld [vmem:[#allocation2 + $0xd0] sm:$0xff]
    %v67 = vld [vmem:[#allocation2 + $0xd8] sm:$0xff]
    %v68 = vld [vmem:[#allocation2 + $0xe0] sm:$0xff]
    %v69 = vld [vmem:[#allocation2 + $0xe8] sm:$0xff]
    %v70 = vld [vmem:[#allocation2 + $0xf0] sm:$0xff]
    %v71 = vld [vmem:[#allocation2 + $0xf8] sm:$0xff]
    %v72 = vld [vmem:[#allocation2 + $0x100] sm:$0xff]
    %v73 = vld [vmem:[#allocation2 + $0x108] sm:$0xff]
    %v74 = vld [vmem:[#allocation2 + $0x110] sm:$0xff]
    %v75 = vld [vmem:[#allocation2 + $0x118] sm:$0xff]
    %v76 = vld [vmem:[#allocation2 + $0x120] sm:$0xff]
    %v77 = vld [vmem:[#allocation2 + $0x128] sm:$0xff]
    %v78 = vld [vmem:[#allocation2 + $0x130] sm:$0xff]
    %v79 = vld [vmem:[#allocation2 + $0x138] sm:$0xff]
    %v80 = vld [vmem:[#allocation2 + $0x140] sm:$0xff]
    %v81 = vld [vmem:[#allocation2 + $0x148] sm:$0xff]
    %v82 = vld [vmem:[#allocation2 + $0x150] sm:$0xff]
    %v83 = vld [vmem:[#allocation2 + $0x158] sm:$0xff]
    %v84 = vld [vmem:[#allocation2 + $0x160] sm:$0xff]
    %v85 = vld [vmem:[#allocation2 + $0x168] sm:$0xff]
    %v86 = vld [vmem:[#allocation2 + $0x170] sm:$0xff]
    %v87 = vld [vmem:[#allocation2 + $0x178] sm:$0xff]
    %v88 = vld [vmem:[#allocation2 + $0x180] sm:$0xff]
    %v89 = vld [vmem:[#allocation2 + $0x188] sm:$0xff]
    %v90 = vld [vmem:[#allocation2 + $0x190] sm:$0xff]
    %v91 = vld [vmem:[#allocation2 + $0x198] sm:$0xff]
    %v92 = vld [vmem:[#allocation2 + $0x1a0] sm:$0xff]
    %v93 = vld [vmem:[#allocation2 + $0x1a8] sm:$0xff]
    %v94 = vld [vmem:[#allocation2 + $0x1b0] sm:$0xff]
    %v95 = vld [vmem:[#allocation2 + $0x1b8] sm:$0xff]
    %v96 = vld [vmem:[#allocation2 + $0x1c0] sm:$0xff]
    %v97 = vld [vmem:[#allocation2 + $0x1c8] sm:$0xff]
    %v98 = vld [vmem:[#allocation2 + $0x1d0] sm:$0xff]
    %v99 = vld [vmem:[#allocation2 + $0x1d8] sm:$0xff]
    %v100 = vld [vmem:[#allocation2 + $0x1e0] sm:$0xff]
    %v101 = vld [vmem:[#allocation2 + $0x1e8] sm:$0xff]
    %v102 = vld [vmem:[#allocation2 + $0x1f0] sm:$0xff]
    %v103 = vld [vmem:[#allocation2 + $0x1f8] sm:$0xff]
    %v104 = vld [vmem:[%s2] sm:$0x1]
    %v106 = vperm.slane %v104, 0
    %108 = vmatpush.msra.mxu0 %v55
    %109 = vmatpush.msra.mxu0 %v54
    %110 = vmatpush.msra.mxu0 %v53
    %111 = vmatpush.msra.mxu0 %v52
    %112 = vmatpush.msra.mxu0 %v51
    %113 = vmatpush.msra.mxu0 %v50
    %114 = vmatpush.msra.mxu0 %v49
    %115 = vmatpush.msra.mxu0 %v48
    %116 = vmatpush.msra.mxu0 %v47
    %117 = vmatpush.msra.mxu0 %v46
    %118 = vmatpush.msra.mxu0 %v45
    %119 = vmatpush.msra.mxu0 %v44
    %120 = vmatpush.msra.mxu0 %v43
    %121 = vmatpush.msra.mxu0 %v42
    %122 = vmatpush.msra.mxu0 %v41
    %123 = vmatpush.msra.mxu0 %v40
    %124 = vmatmul.f32.gmra.mxu0 %v36
    %v125 = vpop.f32.mrf.mxu0
    %v126 = vadd.f32 %v106, %v125
    %127 = vdwg.mxu0
    %128 = vmatpush.msra.mxu0 %v71
    %129 = vmatpush.msra.mxu0 %v70
    %130 = vmatpush.msra.mxu0 %v69
    %131 = vmatpush.msra.mxu0 %v68
    %132 = vmatpush.msra.mxu0 %v67
    %133 = vmatpush.msra.mxu0 %v66
    %134 = vmatpush.msra.mxu0 %v65
    %135 = vmatpush.msra.mxu0 %v64
    %136 = vmatpush.msra.mxu0 %v63
    %137 = vmatpush.msra.mxu0 %v62
    %138 = vmatpush.msra.mxu0 %v61
    %139 = vmatpush.msra.mxu0 %v60
    %140 = vmatpush.msra.mxu0 %v59
    %141 = vmatpush.msra.mxu0 %v58
    %142 = vmatpush.msra.mxu0 %v57
    %143 = vmatpush.msra.mxu0 %v56
    %144 = vmatmul.f32.gmra.mxu0 %v37
    %v145 = vpop.f32.mrf.mxu0
    %v146 = vadd.f32 %v126, %v145
    %147 = vdwg.mxu0
    %148 = vmatpush.msra.mxu0 %v87
    %149 = vmatpush.msra.mxu0 %v86
    %150 = vmatpush.msra.mxu0 %v85
    %151 = vmatpush.msra.mxu0 %v84
    %152 = vmatpush.msra.mxu0 %v83
    %153 = vmatpush.msra.mxu0 %v82
    %154 = vmatpush.msra.mxu0 %v81
    %155 = vmatpush.msra.mxu0 %v80
    %156 = vmatpush.msra.mxu0 %v79
    %157 = vmatpush.msra.mxu0 %v78
    %158 = vmatpush.msra.mxu0 %v77
    %159 = vmatpush.msra.mxu0 %v76
    %160 = vmatpush.msra.mxu0 %v75
    %161 = vmatpush.msra.mxu0 %v74
    %162 = vmatpush.msra.mxu0 %v73
    %163 = vmatpush.msra.mxu0 %v72
    %164 = vmatmul.f32.gmra.mxu0 %v38
    %v165 = vpop.f32.mrf.mxu0
    %v166 = vadd.f32 %v146, %v165
    %167 = vdwg.mxu0
    %168 = vmatpush.msra.mxu0 %v103
    %169 = vmatpush.msra.mxu0 %v102
    %170 = vmatpush.msra.mxu0 %v101
    %171 = vmatpush.msra.mxu0 %v100
    %172 = vmatpush.msra.mxu0 %v99
    %173 = vmatpush.msra.mxu0 %v98
    %174 = vmatpush.msra.mxu0 %v97
    %175 = vmatpush.msra.mxu0 %v96
    %176 = vmatpush.msra.mxu0 %v95
    %177 = vmatpush.msra.mxu0 %v94
    %178 = vmatpush.msra.mxu0 %v93
    %179 = vmatpush.msra.mxu0 %v92
    %180 = vmatpush.msra.mxu0 %v91
    %181 = vmatpush.msra.mxu0 %v90
    %182 = vmatpush.msra.mxu0 %v89
    %183 = vmatpush.msra.mxu0 %v88
    %184 = vmatmul.f32.gmra.mxu0 %v39
    %v185 = vpop.f32.mrf.mxu0
    %v186 = vadd.f32 %v166, %v185
    %187 = vdwg.mxu0
    %vm188 = vcmp.gt.f32.partialorder %v186, 0.0
    %v189 = vmul.f32 %v186, 0.01
    %v190 = vsel %vm188, %v186, %v189
    %v191 = vld [vmem:[%s3] sm:$0xff]
    %v192 = vld [vmem:[%s3 + $0x8] sm:$0xff]
    %v193 = vld [vmem:[%s3 + $0x10] sm:$0xff]
    %v194 = vld [vmem:[%s3 + $0x18] sm:$0xff]
    %v195 = vld [vmem:[%s3 + $0x20] sm:$0xff]
    %v196 = vld [vmem:[%s3 + $0x28] sm:$0xff]
    %v197 = vld [vmem:[%s3 + $0x30] sm:$0xff]
    %v198 = vld [vmem:[%s3 + $0x38] sm:$0xff]
    %v199 = vld [vmem:[%s3 + $0x40] sm:$0xff]
    %v200 = vld [vmem:[%s3 + $0x48] sm:$0xff]
    %v201 = vld [vmem:[%s3 + $0x50] sm:$0xff]
    %v202 = vld [vmem:[%s3 + $0x58] sm:$0xff]
    %v203 = vld [vmem:[%s3 + $0x60] sm:$0xff]
    %v204 = vld [vmem:[%s3 + $0x68] sm:$0xff]
    %v205 = vld [vmem:[%s3 + $0x70] sm:$0xff]
    %v206 = vld [vmem:[%s3 + $0x78] sm:$0xff]
    %v207 = vld [vmem:[%s4] sm:$0x1]
    %v209 = vperm.slane %v207, 0
    %211 = vmatpush.msra.mxu0 %v206
    %212 = vmatpush.msra.mxu0 %v205
    %213 = vmatpush.msra.mxu0 %v204
    %214 = vmatpush.msra.mxu0 %v203
    %215 = vmatpush.msra.mxu0 %v202
    %216 = vmatpush.msra.mxu0 %v201
    %217 = vmatpush.msra.mxu0 %v200
    %218 = vmatpush.msra.mxu0 %v199
    %219 = vmatpush.msra.mxu0 %v198
    %220 = vmatpush.msra.mxu0 %v197
    %221 = vmatpush.msra.mxu0 %v196
    %222 = vmatpush.msra.mxu0 %v195
    %223 = vmatpush.msra.mxu0 %v194
    %224 = vmatpush.msra.mxu0 %v193
    %225 = vmatpush.msra.mxu0 %v192
    %226 = vmatpush.msra.mxu0 %v191
    %227 = vmatmul.f32.gmra.mxu0 %v190
    %v228 = vpop.f32.mrf.mxu0
    %v229 = vadd.f32 %v209, %v228
    %230 = vdwg.mxu0
    %v231 = vlaneseq
    %v232 = vand.u32 %v231, 127
    %vm233 = vcmp.eq.s32.totalorder %v232, 1
    %vm234 = vcmp.eq.s32.totalorder %v232, 3
    %vm235 = vmor %vm233, %vm234
    %vm236 = vcmp.gt.f32.partialorder %v229, 20.0
    %v237 = vmin.f32 %v229, 20.0
    %v238 = vmul.f32 %v237, 1.442695
    %v239 = vpow.pop %v238
    %v240 = vadd.f32 %v239, 1.0
    %v241 = vlog2.pop %v240
    %v242 = vmul.f32 %v241, 0.6931472
    %v243 = vmul.f32 -0.5, %v239
    %v244 = vadd.f32 %v243, 1.0
    %v245 = vmul.f32 %v244, %v239
    %v246 = vand.u32 2147483647, %v239
    %vm247 = vcmp.lt.f32.partialorder %v246, 0.0004427343
    %v248 = vsel %vm247, %v245, %v242
    %v249 = vsel %vm236, %v229, %v248
    %v250 = vsel %vm235, %v249, %v229
    %vm251 = vcmask 64512
    %252 = vst.msk [vmem:[%s5] sm:$0xff] %vm251, %v250
    // Predicated region
    $region26: #{pvn_stage2_forward.1} parent=1 // pred_check
      _
    $region27: #{pvn_stage2_forward.1} parent=1 // pred_check_branch
      %254 = sbr.rel (0) target = $region29
    $region28: #{pvn_stage2_forward.1} parent=1 // pred_region
      _
    $region29: #{pvn_stage2_forward.1} parent=1 // pred_fallthru
      _
    // Predicated region
    $region30: #{pvn_stage2_forward.1} parent=1 // pred_check
      _
    $region31: #{pvn_stage2_forward.1} parent=1 // pred_check_branch
      %256 = sbr.rel (0) target = $region33
    $region32: #{pvn_stage2_forward.1} parent=1 // pred_region
      _
    $region33: #{pvn_stage2_forward.1} parent=1 // pred_fallthru
      _
    %257 = vsyncpa [#allocation3], 1

</llo_original>
